<compile_context>
chip_gen: v5e
topology: v5e:2x2
jax: 0.10.0
libtpu: 0.0.40
codegen_flags: <defaults>
</compile_context>

<pallas_src>
import functools

import jax
import jax.numpy as jnp
from jax.experimental import pallas as pl
from jax.experimental.pallas import tpu as pltpu

HIDDEN = 128       # Linear(256, 128)
OUT_PAD = 128      # lane-dense padded output width (true out_dim sliced in wrapper)


def decoder_dt_kernel(x_ref, w1_ref, b1_ref, w2_ref, b2_ref, o_ref):
    # x_ref: (TB, T, D) activation block in VMEM.
    # Sum over the sequence axis in f32 (the mean's 1/T is already folded into
    # w1 by the wrapper); sublane reduction goes to the XLU, not the VALU.
    s = jnp.sum(x_ref[...].astype(jnp.float32), axis=1)              # (TB, D)

    # Linear(256 -> 128) + ReLU. Cast the LHS to the weight dtype so bf16
    # weights hit the MXU natively; accumulate in f32 either way.
    h = jnp.dot(s.astype(w1_ref.dtype), w1_ref[...],
                preferred_element_type=jnp.float32)
    h = jnp.maximum(h + b1_ref[...].astype(jnp.float32), 0.0)        # (TB, 128)

    # Linear(128 -> OUT_PAD). Padded columns are zero; lane-dense store.
    y = jnp.dot(h.astype(w2_ref.dtype), w2_ref[...],
                preferred_element_type=jnp.float32)
    y = y + b2_ref[...].astype(jnp.float32)
    o_ref[...] = y.astype(o_ref.dtype)                               # (TB, 128)


@functools.partial(jax.jit, static_argnames=("block_b",))
def decoder_dt_forward(state_feat, w1, b1, w2, b2, *, block_b=512):
    B, T, D = state_feat.shape
    out_dim = w2.shape[1]

    # --- static weight transforms (traced once under jit, zero per-call cost)
    # Fold mean's 1/T into the first weight.
    w1s = (w1.astype(jnp.float32) * (1.0 / T)).astype(w1.dtype)      # (D, H)
    b1_2d = b1.reshape(1, HIDDEN)                                    # (1, H)
    # Zero-pad the final projection to a lane-dense 128-wide output.
    w2p = jnp.zeros((HIDDEN, OUT_PAD), w2.dtype).at[:, :out_dim].set(w2)
    b2p = jnp.zeros((1, OUT_PAD), b2.dtype).at[0, :out_dim].set(b2)

    # --- batch tiling: TB rows per grid step (double-buffered by BlockSpec).
    # Budgeted for v7x's 64 MiB VMEM: TB=512, T=8, D=256, f32 -> 4 MiB input
    # block (x2 for double buffering), well under the scoped limit.
    if B <= block_b:
        tb = B                       # single block; equal-to-full-dim is legal
    else:
        tb = block_b                 # multiple of 8 -> legal (TB, 128) out block
    num_blocks = pl.cdiv(B, tb)

    itemsize = jnp.dtype(state_feat.dtype).itemsize
    cost = pl.CostEstimate(
        flops=2 * B * (D * HIDDEN + HIDDEN * OUT_PAD),
        transcendentals=0,
        bytes_accessed=(B * T * D * itemsize
                        + (D * HIDDEN + HIDDEN + HIDDEN * OUT_PAD + OUT_PAD) * 4
                        + B * OUT_PAD * 4),
    )

    out_padded = pl.pallas_call(
        decoder_dt_kernel,
        out_shape=jax.ShapeDtypeStruct((B, OUT_PAD), jnp.float32),
        grid_spec=pltpu.PrefetchScalarGridSpec(
            num_scalar_prefetch=0,
            grid=(num_blocks,),
            in_specs=[
                pl.BlockSpec((tb, T, D), lambda i: (i, 0, 0)),       # activations
                pl.BlockSpec((D, HIDDEN), lambda i: (0, 0)),         # w1 (scaled)
                pl.BlockSpec((1, HIDDEN), lambda i: (0, 0)),         # b1
                pl.BlockSpec((HIDDEN, OUT_PAD), lambda i: (0, 0)),   # w2 (padded)
                pl.BlockSpec((1, OUT_PAD), lambda i: (0, 0)),        # b2 (padded)
            ],
            out_specs=pl.BlockSpec((tb, OUT_PAD), lambda i: (i, 0)),
        ),
        compiler_params=pltpu.CompilerParams(
            # Batch blocks are independent -> shard across v7x's 2 TensorCores.
            dimension_semantics=("parallel",),
        ),
        cost_estimate=cost,
    )(state_feat, w1s, b1_2d, w2p, b2p)

    # Slice the true out_dim columns off the lane-dense padded output.
    return out_padded[:, :out_dim]


def init_params(key, in_dim=256, hidden=HIDDEN, out_dim=3):
    k1, k2, k3, k4 = jax.random.split(key, 4)
    # Deterministic synthetic init (uniform, roughly torch's Linear fan-in scale).
    lim1 = 1.0 / jnp.sqrt(in_dim)
    lim2 = 1.0 / jnp.sqrt(hidden)
    w1 = jax.random.uniform(k1, (in_dim, hidden), jnp.float32, -lim1, lim1)
    b1 = jax.random.uniform(k2, (hidden,), jnp.float32, -lim1, lim1)
    w2 = jax.random.uniform(k3, (hidden, out_dim), jnp.float32, -lim2, lim2)
    b2 = jax.random.uniform(k4, (out_dim,), jnp.float32, -lim2, lim2)
    return w1, b1, w2, b2


def reference_forward(state_feat, w1, b1, w2, b2):
    x = jnp.mean(state_feat.astype(jnp.float32), axis=1)
    x = jnp.maximum(x @ w1 + b1, 0.0)
    return x @ w2 + b2


if __name__ == "__main__":
    key = jax.random.PRNGKey(0)
    k_params, k_x = jax.random.split(key)

    B, T, D = 2, 8, 256          # batch=2, seq=8, feature must be 256 (Linear(256,128))
    out_dim = 3

    w1, b1, w2, b2 = init_params(k_params, D, HIDDEN, out_dim)
    state_feat = jax.random.normal(k_x, (B, T, D), jnp.float32)

    out = decoder_dt_forward(state_feat, w1, b1, w2, b2)
    out = jax.block_until_ready(out)

    ref = reference_forward(state_feat, w1, b1, w2, b2)
    assert out.shape == (B, out_dim)
    assert jnp.allclose(out, ref, atol=1e-4, rtol=1e-4), "mismatch vs JAX reference"

    # Exercise the multi-block / partial-last-block path at a larger batch.
    B2 = 1000
    sf2 = jax.random.normal(jax.random.PRNGKey(1), (B2, T, D), jnp.float32)
    out2 = jax.block_until_ready(decoder_dt_forward(sf2, w1, b1, w2, b2))
    ref2 = reference_forward(sf2, w1, b1, w2, b2)
    assert out2.shape == (B2, out_dim)
    assert jnp.allclose(out2, ref2, atol=1e-3, rtol=1e-3), "mismatch (large batch)"

    print("KERNEL_OK")
</pallas_src>

<mosaic_0001>
module attributes {stable_mosaic.version = 11 : i64} {
  func.func @decoder_dt_kernel(%arg0: i32, %arg1: memref<2x8x256xf32, #tpu.memory_space<vmem>>, %arg2: memref<256x128xf32, #tpu.memory_space<vmem>>, %arg3: memref<1x128xf32, #tpu.memory_space<vmem>>, %arg4: memref<128x128xf32, #tpu.memory_space<vmem>>, %arg5: memref<1x128xf32, #tpu.memory_space<vmem>>, %arg6: memref<2x128xf32, #tpu.memory_space<vmem>>) attributes {dimension_semantics = [#tpu.dimension_semantics<parallel>], iteration_bounds = array<i64: 1>, scalar_prefetch = 0 : i64, scratch_operands = 0 : i64, tpu.core_type = #tpu.core_type<tc>, window_params = [{transform_indices = @transform_0, window_bounds = array<i64: 2, 8, 256>}, {pipeline_mode = #tpu.pipeline_mode<synchronous>, transform_indices = @transform_1, window_bounds = array<i64: 256, 128>}, {pipeline_mode = #tpu.pipeline_mode<synchronous>, transform_indices = @transform_2, window_bounds = array<i64: 1, 128>}, {pipeline_mode = #tpu.pipeline_mode<synchronous>, transform_indices = @transform_3, window_bounds = array<i64: 128, 128>}, {pipeline_mode = #tpu.pipeline_mode<synchronous>, transform_indices = @transform_4, window_bounds = array<i64: 1, 128>}, {transform_indices = @transform_5, window_bounds = array<i64: 2, 128>}]} {
    %c0 = arith.constant 0 : index
    %c0_0 = arith.constant 0 : index
    %c0_1 = arith.constant 0 : index
    %0 = vector.load %arg1[%c0, %c0_0, %c0_1] : memref<2x8x256xf32, #tpu.memory_space<vmem>>, vector<2x8x256xf32>
    %cst = arith.constant dense<0.000000e+00> : vector<2x256xf32>
    %1 = vector.multi_reduction <add>, %0, %cst [1] : vector<2x8x256xf32> to vector<2x256xf32>
    %c0_2 = arith.constant 0 : index
    %c0_3 = arith.constant 0 : index
    %2 = vector.load %arg2[%c0_2, %c0_3] : memref<256x128xf32, #tpu.memory_space<vmem>>, vector<256x128xf32>
    %cst_4 = arith.constant dense<0.000000e+00> : vector<2x128xf32>
    %3 = tpu.matmul %1, %2, %cst_4 {dimension_numbers = #tpu.dot_dimension_numbers<[1], [0], [0], [1], [0, 0, 1, 1], [], []>} : vector<2x256xf32>, vector<256x128xf32>, vector<2x128xf32> -> vector<2x128xf32>
    %c0_5 = arith.constant 0 : index
    %c0_6 = arith.constant 0 : index
    %4 = vector.load %arg3[%c0_5, %c0_6] : memref<1x128xf32, #tpu.memory_space<vmem>>, vector<1x128xf32>
    %5 = vector.broadcast %4 : vector<1x128xf32> to vector<2x128xf32>
    %6 = arith.addf %3, %5 : vector<2x128xf32>
    %cst_7 = arith.constant 0.000000e+00 : f32
    %7 = vector.broadcast %cst_7 : f32 to vector<2x128xf32>
    %8 = arith.maximumf %6, %7 : vector<2x128xf32>
    %c0_8 = arith.constant 0 : index
    %c0_9 = arith.constant 0 : index
    %9 = vector.load %arg4[%c0_8, %c0_9] : memref<128x128xf32, #tpu.memory_space<vmem>>, vector<128x128xf32>
    %cst_10 = arith.constant dense<0.000000e+00> : vector<2x128xf32>
    %10 = tpu.matmul %8, %9, %cst_10 {dimension_numbers = #tpu.dot_dimension_numbers<[1], [0], [0], [1], [0, 0, 1, 1], [], []>} : vector<2x128xf32>, vector<128x128xf32>, vector<2x128xf32> -> vector<2x128xf32>
    %c0_11 = arith.constant 0 : index
    %c0_12 = arith.constant 0 : index
    %11 = vector.load %arg5[%c0_11, %c0_12] : memref<1x128xf32, #tpu.memory_space<vmem>>, vector<1x128xf32>
    %12 = vector.broadcast %11 : vector<1x128xf32> to vector<2x128xf32>
    %13 = arith.addf %10, %12 : vector<2x128xf32>
    %c0_13 = arith.constant 0 : index
    %c0_14 = arith.constant 0 : index
    %14 = vector.load %arg6[%c0_13, %c0_14] : memref<2x128xf32, #tpu.memory_space<vmem>>, vector<2x128xf32>
    tpu.vector_store %arg6[%c0_13, %c0_14], %13 {strides = array<i32>} : memref<2x128xf32, #tpu.memory_space<vmem>>, vector<2x128xf32>,
    return
  }
  func.func @transform_0(%arg0: i32) -> (i32, i32, i32) {
    %c0_i32 = arith.constant 0 : i32
    %c0_i32_0 = arith.constant 0 : i32
    %c0_i32_1 = arith.constant 0 : i32
    return %arg0, %c0_i32, %c0_i32_0 : i32, i32, i32
  }
  func.func @transform_1(%arg0: i32) -> (i32, i32) {
    %c0_i32 = arith.constant 0 : i32
    %c0_i32_0 = arith.constant 0 : i32
    %c0_i32_1 = arith.constant 0 : i32
    return %c0_i32, %c0_i32_0 : i32, i32
  }
  func.func @transform_2(%arg0: i32) -> (i32, i32) {
    %c0_i32 = arith.constant 0 : i32
    %c0_i32_0 = arith.constant 0 : i32
    %c0_i32_1 = arith.constant 0 : i32
    return %c0_i32, %c0_i32_0 : i32, i32
  }
  func.func @transform_3(%arg0: i32) -> (i32, i32) {
    %c0_i32 = arith.constant 0 : i32
    %c0_i32_0 = arith.constant 0 : i32
    %c0_i32_1 = arith.constant 0 : i32
    return %c0_i32, %c0_i32_0 : i32, i32
  }
  func.func @transform_4(%arg0: i32) -> (i32, i32) {
    %c0_i32 = arith.constant 0 : i32
    %c0_i32_0 = arith.constant 0 : i32
    %c0_i32_1 = arith.constant 0 : i32
    return %c0_i32, %c0_i32_0 : i32, i32
  }
  func.func @transform_5(%arg0: i32) -> (i32, i32) {
    %c0_i32 = arith.constant 0 : i32
    %c0_i32_0 = arith.constant 0 : i32
    return %arg0, %c0_i32 : i32, i32
  }
}

</mosaic_0001>

<llo_original>
// kernel: decoder_dt_forward.1
$region0: #{decoder_dt_forward.1}
  #allocation0 [shape = 'u32[]', space=smem, size = 0x4, offset = 0x4, fixed_abs, tag = 'smem constant byte address 0x4 - core index']
  #allocation1 [shape = 'u32[72,128]{1,0:T(1,128)}', space=vmem, size = 0x9000, scoped, tag = 'internal scratch']
  %s0 = inlined_call_operand.vmem [shape: f32[2,8,256], index: 0, kind: input, shape index: {}]
  %s1 = inlined_call_operand.vmem [shape: f32[256,128], index: 1, kind: input, shape index: {}]
  %s2 = inlined_call_operand.vmem [shape: f32[1,128], index: 2, kind: input, shape index: {}]
  %s3 = inlined_call_operand.vmem [shape: f32[128,128], index: 3, kind: input, shape index: {}]
  %s4 = inlined_call_operand.vmem [shape: f32[1,128], index: 4, kind: input, shape index: {}]
  %s5 = inlined_call_operand.hbm [shape: f32[2,128], index: 5, kind: output, shape index: {}]
  %s6 = sld [smem:[#allocation0]]
  $region30: #{decoder_dt_forward.1} parent=0
    _
  %s8 = ssub.s32 1, %s6
  %s9 = scalar_select 0, %s8, %s6
  $region1: #{decoder_dt_forward.1} parent=0
    #allocation2 [shape = 'u8[1024]{0}', space=vmem, size = 0x400, scoped, tag = 'output window, operand 0, single buffered']
    #allocation3 [shape = 's32[1]{0}', space=sflag, size = 0x4, scoped, tag = 'scoped memory for decoder_dt_forward.1']
    %10 = vsyncpa [#allocation3], 0
    // Predicated region
    $region2: #{decoder_dt_forward.1} parent=1 // pred_check
      _
    $region3: #{decoder_dt_forward.1} parent=1 // pred_check_branch
      %12 = sbr.rel (0) target = $region5
    $region4: #{decoder_dt_forward.1} parent=1 // pred_region
      _
    $region5: #{decoder_dt_forward.1} parent=1 // pred_fallthru
      _
    // Predicated region
    $region6: #{decoder_dt_forward.1} parent=1 // pred_check
      _
    $region7: #{decoder_dt_forward.1} parent=1 // pred_check_branch
      %14 = sbr.rel (0) target = $region9
    $region8: #{decoder_dt_forward.1} parent=1 // pred_region
      _
    $region9: #{decoder_dt_forward.1} parent=1 // pred_fallthru
      _
    // Predicated region
    $region10: #{decoder_dt_forward.1} parent=1 // pred_check
      _
    $region11: #{decoder_dt_forward.1} parent=1 // pred_check_branch
      %16 = sbr.rel (0) target = $region13
    $region12: #{decoder_dt_forward.1} parent=1 // pred_region
      _
    $region13: #{decoder_dt_forward.1} parent=1 // pred_fallthru
      _
    // Predicated region
    $region14: #{decoder_dt_forward.1} parent=1 // pred_check
      _
    $region15: #{decoder_dt_forward.1} parent=1 // pred_check_branch
      %18 = sbr.rel (0) target = $region17
    $region16: #{decoder_dt_forward.1} parent=1 // pred_region
      _
    $region17: #{decoder_dt_forward.1} parent=1 // pred_fallthru
      _
    // Predicated region
    $region18: #{decoder_dt_forward.1} parent=1 // pred_check
      _
    $region19: #{decoder_dt_forward.1} parent=1 // pred_check_branch
      %20 = sbr.rel (0) target = $region21
    $region20: #{decoder_dt_forward.1} parent=1 // pred_region
      _
    $region21: #{decoder_dt_forward.1} parent=1 // pred_fallthru
      _
    %v21 = vld [vmem:[%s0] sm:$0xff]
    %v22 = vld [vmem:[%s0 + $0x8] sm:$0xff]
    %v23 = vld [vmem:[%s0 + $0x10] sm:$0xff]
    %v24 = vld [vmem:[%s0 + $0x18] sm:$0xff]
    %v25 = vrot.slane %v21, 4
    %v26 = vadd.f32 %v21, %v25
    %v27 = vrot.slane %v26, 2
    %v28 = vadd.f32 %v26, %v27
    %v29 = vrot.slane %v28, 1
    %v30 = vadd.f32 %v28, %v29
    %v31 = vrot.slane %v22, 4
    %v32 = vadd.f32 %v22, %v31
    %v33 = vrot.slane %v32, 2
    %v34 = vadd.f32 %v32, %v33
    %v35 = vrot.slane %v34, 1
    %v36 = vadd.f32 %v34, %v35
    %v37 = vrot.slane %v23, 4
    %v38 = vadd.f32 %v23, %v37
    %v39 = vrot.slane %v38, 2
    %v40 = vadd.f32 %v38, %v39
    %v41 = vrot.slane %v40, 1
    %v42 = vadd.f32 %v40, %v41
    %v43 = vrot.slane %v24, 4
    %v44 = vadd.f32 %v24, %v43
    %v45 = vrot.slane %v44, 2
    %v46 = vadd.f32 %v44, %v45
    %v47 = vrot.slane %v46, 1
    %v48 = vadd.f32 %v46, %v47
    %v49 = vld [vmem:[%s1] sm:$0xff]
    %v50 = vld [vmem:[%s1 + $0x8] sm:$0xff]
    %v51 = vld [vmem:[%s1 + $0x10] sm:$0xff]
    %v52 = vld [vmem:[%s1 + $0x18] sm:$0xff]
    %v53 = vld [vmem:[%s1 + $0x20] sm:$0xff]
    %v54 = vld [vmem:[%s1 + $0x28] sm:$0xff]
    %v55 = vld [vmem:[%s1 + $0x30] sm:$0xff]
    %v56 = vld [vmem:[%s1 + $0x38] sm:$0xff]
    %v57 = vld [vmem:[%s1 + $0x40] sm:$0xff]
    %v58 = vld [vmem:[%s1 + $0x48] sm:$0xff]
    %v59 = vld [vmem:[%s1 + $0x50] sm:$0xff]
    %v60 = vld [vmem:[%s1 + $0x58] sm:$0xff]
    %v61 = vld [vmem:[%s1 + $0x60] sm:$0xff]
    %v62 = vld [vmem:[%s1 + $0x68] sm:$0xff]
    %v63 = vld [vmem:[%s1 + $0x70] sm:$0xff]
    %v64 = vld [vmem:[%s1 + $0x78] sm:$0xff]
    %v65 = vld [vmem:[%s1 + $0x80] sm:$0xff]
    %v66 = vld [vmem:[%s1 + $0x88] sm:$0xff]
    %v67 = vld [vmem:[%s1 + $0x90] sm:$0xff]
    %v68 = vld [vmem:[%s1 + $0x98] sm:$0xff]
    %v69 = vld [vmem:[%s1 + $0xa0] sm:$0xff]
    %v70 = vld [vmem:[%s1 + $0xa8] sm:$0xff]
    %v71 = vld [vmem:[%s1 + $0xb0] sm:$0xff]
    %v72 = vld [vmem:[%s1 + $0xb8] sm:$0xff]
    %v73 = vld [vmem:[%s1 + $0xc0] sm:$0xff]
    %v74 = vld [vmem:[%s1 + $0xc8] sm:$0xff]
    %v75 = vld [vmem:[%s1 + $0xd0] sm:$0xff]
    %v76 = vld [vmem:[%s1 + $0xd8] sm:$0xff]
    %v77 = vld [vmem:[%s1 + $0xe0] sm:$0xff]
    %v78 = vld [vmem:[%s1 + $0xe8] sm:$0xff]
    %v79 = vld [vmem:[%s1 + $0xf0] sm:$0xff]
    %v80 = vld [vmem:[%s1 + $0xf8] sm:$0xff]
    %v81 = vld [vmem:[%s2] sm:$0x1]
    %v83 = vperm.slane %v81, 0
    %vm89 = vcmask 1041409
    %v90 = vsel %vm89, %v42, %v30
    %v91 = vsel %vm89, %v48, %v36
    %94 = vmatpush.msra.mxu0 %v64
    %95 = vmatpush.msra.mxu0 %v63
    %96 = vmatpush.msra.mxu0 %v62
    %97 = vmatpush.msra.mxu0 %v61
    %98 = vmatpush.msra.mxu0 %v60
    %99 = vmatpush.msra.mxu0 %v59
    %100 = vmatpush.msra.mxu0 %v58
    %101 = vmatpush.msra.mxu0 %v57
    %102 = vmatpush.msra.mxu0 %v56
    %103 = vmatpush.msra.mxu0 %v55
    %104 = vmatpush.msra.mxu0 %v54
    %105 = vmatpush.msra.mxu0 %v53
    %106 = vmatpush.msra.mxu0 %v52
    %107 = vmatpush.msra.mxu0 %v51
    %108 = vmatpush.msra.mxu0 %v50
    %109 = vmatpush.msra.mxu0 %v49
    %110 = vmatmul.f32.gmra.mxu0 %v90
    %v111 = vpop.f32.mrf.mxu0
    %v112 = vadd.f32 %v83, %v111
    %113 = vdwg.mxu0
    %114 = vmatpush.msra.mxu0 %v80
    %115 = vmatpush.msra.mxu0 %v79
    %116 = vmatpush.msra.mxu0 %v78
    %117 = vmatpush.msra.mxu0 %v77
    %118 = vmatpush.msra.mxu0 %v76
    %119 = vmatpush.msra.mxu0 %v75
    %120 = vmatpush.msra.mxu0 %v74
    %121 = vmatpush.msra.mxu0 %v73
    %122 = vmatpush.msra.mxu0 %v72
    %123 = vmatpush.msra.mxu0 %v71
    %124 = vmatpush.msra.mxu0 %v70
    %125 = vmatpush.msra.mxu0 %v69
    %126 = vmatpush.msra.mxu0 %v68
    %127 = vmatpush.msra.mxu0 %v67
    %128 = vmatpush.msra.mxu0 %v66
    %129 = vmatpush.msra.mxu0 %v65
    %130 = vmatmul.f32.gmra.mxu0 %v91
    %v131 = vpop.f32.mrf.mxu0
    %v132 = vadd.f32 %v112, %v131
    %133 = vdwg.mxu0
    %v134 = vmax.f32 %v132, 0.0
    %v135 = vld [vmem:[%s3] sm:$0xff]
    %v136 = vld [vmem:[%s3 + $0x8] sm:$0xff]
    %v137 = vld [vmem:[%s3 + $0x10] sm:$0xff]
    %v138 = vld [vmem:[%s3 + $0x18] sm:$0xff]
    %v139 = vld [vmem:[%s3 + $0x20] sm:$0xff]
    %v140 = vld [vmem:[%s3 + $0x28] sm:$0xff]
    %v141 = vld [vmem:[%s3 + $0x30] sm:$0xff]
    %v142 = vld [vmem:[%s3 + $0x38] sm:$0xff]
    %v143 = vld [vmem:[%s3 + $0x40] sm:$0xff]
    %v144 = vld [vmem:[%s3 + $0x48] sm:$0xff]
    %v145 = vld [vmem:[%s3 + $0x50] sm:$0xff]
    %v146 = vld [vmem:[%s3 + $0x58] sm:$0xff]
    %v147 = vld [vmem:[%s3 + $0x60] sm:$0xff]
    %v148 = vld [vmem:[%s3 + $0x68] sm:$0xff]
    %v149 = vld [vmem:[%s3 + $0x70] sm:$0xff]
    %v150 = vld [vmem:[%s3 + $0x78] sm:$0xff]
    %v151 = vld [vmem:[%s4] sm:$0x1]
    %v153 = vperm.slane %v151, 0
    %155 = vmatpush.msra.mxu0 %v150
    %156 = vmatpush.msra.mxu0 %v149
    %157 = vmatpush.msra.mxu0 %v148
    %158 = vmatpush.msra.mxu0 %v147
    %159 = vmatpush.msra.mxu0 %v146
    %160 = vmatpush.msra.mxu0 %v145
    %161 = vmatpush.msra.mxu0 %v144
    %162 = vmatpush.msra.mxu0 %v143
    %163 = vmatpush.msra.mxu0 %v142
    %164 = vmatpush.msra.mxu0 %v141
    %165 = vmatpush.msra.mxu0 %v140
    %166 = vmatpush.msra.mxu0 %v139
    %167 = vmatpush.msra.mxu0 %v138
    %168 = vmatpush.msra.mxu0 %v137
    %169 = vmatpush.msra.mxu0 %v136
    %170 = vmatpush.msra.mxu0 %v135
    %171 = vmatmul.f32.gmra.mxu0 %v134
    %v172 = vpop.f32.mrf.mxu0
    %v173 = vadd.f32 %v153, %v172
    %174 = vdwg.mxu0
    %175 = vst [vmem:[#allocation2] sm:$0x3] %v173
    // Predicated region
    $region22: #{decoder_dt_forward.1} parent=1 // pred_check
      _
    $region23: #{decoder_dt_forward.1} parent=1 // pred_check_branch
      %177 = sbr.rel (0) target = $region25
    $region24: #{decoder_dt_forward.1} parent=1 // pred_region
      %179 = vsyncadd [#allocation3], 0
      %s181 = sshll.u32 [#allocation2], 4
      %s182 = int_to_ptr.vmem [resolvable:$true] %s181
      %s183 = sshll.u32 %s5, 4
      %s184 = int_to_ptr.hbm [resolvable:$true] %s183
      %186 = dma.vmem_to_hbm [thread:$0]  %s182, 32, %s184, [#allocation3]
    $region25: #{decoder_dt_forward.1} parent=1 // pred_fallthru
      _
    // Predicated region
    $region26: #{decoder_dt_forward.1} parent=1 // pred_check
      _
    $region27: #{decoder_dt_forward.1} parent=1 // pred_check_branch
      %188 = sbr.rel (0) target = $region29
    $region28: #{decoder_dt_forward.1} parent=1 // pred_region
      %190 = dma.done [#allocation3], 32
    $region29: #{decoder_dt_forward.1} parent=1 // pred_fallthru
      _
    %191 = vsyncpa [#allocation3], 1

</llo_original>
